<compile_context>
chip_gen: v6e
topology: v6e:2x2x1
jax: 0.10.0
libtpu: 0.0.40
codegen_flags: <defaults>
</compile_context>

<pallas_src>
import jax
import jax.numpy as jnp
from jax.experimental import pallas as pl
from jax.experimental.pallas import tpu as pltpu

K = 5          # number of negative samples (module arg k)
CLASSES = 10   # number of classes
EPS = 1e-10

LANE = 128
MAX_TILE = 16384   # lanes per grid step; ~2 MiB of input -> well past DMA amortization


def _round_up(x, m):
    return ((x + m - 1) // m) * m


def _make_kernel(batch, tile_b, eps):
    def kernel(yhat_ref, ind_ref, p_ref, out_ref):
        # yhat_ref: [C, TB] (f32 or bf16), ind_ref: [kp1, TB] i32,
        # p_ref: [kp1, TB] f32, out_ref: [1, 128] f32 (per-tile partial).
        x = yhat_ref[...].astype(jnp.float32)           # [C, TB]
        idx = ind_ref[...]                               # [kp1, TB] i32
        p = p_ref[...]                                   # [kp1, TB] f32

        # Gather logits[j, b] = x[idx[j, b], b], fully stacked over the k+1 rows:
        # static loop over the C classes, each iteration is one [kp1, TB] select-add.
        logits = jnp.zeros(idx.shape, jnp.float32)
        for c in range(x.shape[0]):                      # C = 10, static
            logits = logits + jnp.where(idx == c, x[c:c + 1, :], 0.0)

        # max over the k+1 gathered logits (matches torch.max(logits, -1))
        maxx = jnp.max(logits, axis=0, keepdims=True)    # [1, TB]

        # w = exp(logit - max) / p   (approx reciprocal on the stacked block; EUP)
        inv_p = pl.reciprocal(p, approx=True)            # [kp1, TB]
        w = jnp.exp(logits - maxx) * inv_p               # [kp1, TB]

        # exact divide for the final normalization (one per sample)
        denom = jnp.sum(w, axis=0, keepdims=True)        # [1, TB]
        out = w * (1.0 / denom)                          # [kp1, TB]

        # contrib[0] = log(out0 + eps); contrib[j>0] = log(1 - out_j + eps)
        row = jax.lax.broadcasted_iota(jnp.int32, out.shape, 0)
        pos = jnp.where(row == 0, out, 1.0 - out)
        contrib = jnp.log(pos + eps)                     # single stacked log

        # mask padded batch lanes (only the last tile can be short)
        lane = jax.lax.broadcasted_iota(jnp.int32, (1, out.shape[1]), 1)
        valid = (pl.program_id(0) * tile_b + lane) < batch
        contrib = jnp.where(valid, contrib, 0.0)

        # one scalar partial per tile, broadcast over a lane-dense [1, 128] slab
        total = jnp.sum(contrib)
        out_ref[...] = jnp.full(out_ref.shape, total, dtype=out_ref.dtype)

    return kernel


def blackout3_loss(yhat_cb, ind_cb, p_cb):
    """BlackOut loss.

    Class-major, batch-on-lanes layout (producers should emit this directly):
      yhat_cb: [C, B]   logits (f32 or bf16)
      ind_cb : [k+1, B] sampled class indices, row 0 = label
      p_cb   : [k+1, B] eval probabilities for those indices
    """
    C, B = yhat_cb.shape
    kp1 = ind_cb.shape[0]

    b_lane = _round_up(B, LANE)
    tile_b = min(MAX_TILE, b_lane)
    if b_lane >= 2 * LANE:
        # keep >= 2 tiles so v7x's two TensorCores both get work
        tile_b = min(tile_b, _round_up((b_lane + 1) // 2, LANE))
    b_pad = _round_up(b_lane, tile_b)
    n_tiles = b_pad // tile_b
    pad = b_pad - B

    ind_cb = ind_cb.astype(jnp.int32)
    p_cb = p_cb.astype(jnp.float32)
    if pad:
        yhat_cb = jnp.pad(yhat_cb, ((0, 0), (0, pad)))
        ind_cb = jnp.pad(ind_cb, ((0, 0), (0, pad)))
        p_cb = jnp.pad(p_cb, ((0, 0), (0, pad)), constant_values=1.0)

    # TODO(synk): ind could be shipped as int16 (CLASSES=10) to shave HBM traffic;
    # kept int32 for lowering safety.
    partials = pl.pallas_call(
        _make_kernel(B, tile_b, EPS),
        out_shape=jax.ShapeDtypeStruct((1, n_tiles * LANE), jnp.float32),
        grid=(n_tiles,),
        in_specs=[
            pl.BlockSpec((C, tile_b), lambda i: (0, i)),
            pl.BlockSpec((kp1, tile_b), lambda i: (0, i)),
            pl.BlockSpec((kp1, tile_b), lambda i: (0, i)),
        ],
        out_specs=pl.BlockSpec((1, LANE), lambda i: (0, i)),
        compiler_params=pltpu.CompilerParams(
            dimension_semantics=("parallel",),
            vmem_limit_bytes=32 * 1024 * 1024,
        ),
    )(yhat_cb, ind_cb, p_cb)

    # one scalar per tile (broadcast over 128 lanes) -> take lane 0 of each tile
    tile_sums = partials.reshape(n_tiles, LANE)[:, 0]
    return -jnp.sum(tile_sums) / (B * kp1)


if __name__ == "__main__":
    key = jax.random.PRNGKey(0)
    k1, k2, k3 = jax.random.split(key, 3)

    B, C, KNEG = 8, CLASSES, K

    # TODO(synk): generate_p_cifar100 is not defined in the spec; use a synthetic
    # symmetric probability matrix with the same structure (diag = 1-p, off-diag uniform).
    p_mix = 0.5
    eye = jnp.eye(C, dtype=jnp.float32)
    eval_prob = (1.0 - p_mix) * eye + (p_mix / (C - 1)) * (1.0 - eye)            # [C, C]
    samp = eval_prob * (1.0 - eye)
    sampling_prob = samp / jnp.sum(samp, axis=-1, keepdims=True)                 # [C, C]

    yhat = jax.random.normal(k1, (B, C), dtype=jnp.float32)                      # logits [B, C]
    y = jax.random.randint(k2, (B,), 0, C, dtype=jnp.int32)                      # labels

    # host/XLA-side sampling (mirrors np.random.choice(p=sampling_prob[y]) in the ref)
    neg = jax.random.categorical(
        k3, jnp.log(sampling_prob[y] + 1e-30), shape=(KNEG, B)).T.astype(jnp.int32)
    ind = jnp.concatenate([y[:, None], neg], axis=1)                             # [B, k+1]
    p_w = eval_prob[y[:, None], ind]                                             # [B, k+1]

    # class-major / batch-on-lanes layout for the kernel (producers should emit
    # these layouts directly in real use; the transposes here are demo-only).
    loss = blackout3_loss(yhat.T, ind.T, p_w.T)
    jax.block_until_ready(loss)
    print("KERNEL_OK")
</pallas_src>

<mosaic_0001>
module attributes {stable_mosaic.version = 11 : i64} {
  func.func @kernel(%arg0: i32, %arg1: memref<10x128xf32, #tpu.memory_space<vmem>>, %arg2: memref<6x128xi32, #tpu.memory_space<vmem>>, %arg3: memref<6x128xf32, #tpu.memory_space<vmem>>, %arg4: memref<1x128xf32, #tpu.memory_space<vmem>>) attributes {dimension_semantics = [#tpu.dimension_semantics<parallel>], iteration_bounds = array<i64: 1>, scalar_prefetch = 0 : i64, scratch_operands = 0 : i64, tpu.core_type = #tpu.core_type<tc>, window_params = [{transform_indices = @transform_0, window_bounds = array<i64: 10, 128>}, {transform_indices = @transform_1, window_bounds = array<i64: 6, 128>}, {transform_indices = @transform_2, window_bounds = array<i64: 6, 128>}, {transform_indices = @transform_3, window_bounds = array<i64: 1, 128>}]} {
    %c0 = arith.constant 0 : index
    %c0_0 = arith.constant 0 : index
    %0 = vector.load %arg1[%c0, %c0_0] : memref<10x128xf32, #tpu.memory_space<vmem>>, vector<10x128xf32>
    %c0_1 = arith.constant 0 : index
    %c0_2 = arith.constant 0 : index
    %1 = vector.load %arg2[%c0_1, %c0_2] : memref<6x128xi32, #tpu.memory_space<vmem>>, vector<6x128xi32>
    %c0_3 = arith.constant 0 : index
    %c0_4 = arith.constant 0 : index
    %2 = vector.load %arg3[%c0_3, %c0_4] : memref<6x128xf32, #tpu.memory_space<vmem>>, vector<6x128xf32>
    %cst = arith.constant 0.000000e+00 : f32
    %3 = vector.broadcast %cst : f32 to vector<6x128xf32>
    %c0_i32 = arith.constant 0 : i32
    %4 = vector.broadcast %c0_i32 : i32 to vector<6x128xi32>
    %5 = arith.cmpi eq, %1, %4 : vector<6x128xi32>
    %6 = vector.extract_strided_slice %0 {offsets = [0, 0], sizes = [1, 128], strides = [1, 1]} : vector<10x128xf32> to vector<1x128xf32>
    %cst_5 = arith.constant 0.000000e+00 : f32
    %7 = vector.shape_cast %6 : vector<1x128xf32> to vector<1x128xf32>
    %8 = vector.broadcast %7 : vector<1x128xf32> to vector<6x128xf32>
    %9 = vector.broadcast %cst_5 : f32 to vector<6x128xf32>
    %10 = arith.select %5, %8, %9 : vector<6x128xi1>, vector<6x128xf32>
    %11 = arith.addf %3, %10 : vector<6x128xf32>
    %c1_i32 = arith.constant 1 : i32
    %12 = vector.broadcast %c1_i32 : i32 to vector<6x128xi32>
    %13 = arith.cmpi eq, %1, %12 : vector<6x128xi32>
    %14 = vector.extract_strided_slice %0 {offsets = [1, 0], sizes = [1, 128], strides = [1, 1]} : vector<10x128xf32> to vector<1x128xf32>
    %cst_6 = arith.constant 0.000000e+00 : f32
    %15 = vector.shape_cast %14 : vector<1x128xf32> to vector<1x128xf32>
    %16 = vector.broadcast %15 : vector<1x128xf32> to vector<6x128xf32>
    %17 = vector.broadcast %cst_6 : f32 to vector<6x128xf32>
    %18 = arith.select %13, %16, %17 : vector<6x128xi1>, vector<6x128xf32>
    %19 = arith.addf %11, %18 : vector<6x128xf32>
    %c2_i32 = arith.constant 2 : i32
    %20 = vector.broadcast %c2_i32 : i32 to vector<6x128xi32>
    %21 = arith.cmpi eq, %1, %20 : vector<6x128xi32>
    %22 = vector.extract_strided_slice %0 {offsets = [2, 0], sizes = [1, 128], strides = [1, 1]} : vector<10x128xf32> to vector<1x128xf32>
    %cst_7 = arith.constant 0.000000e+00 : f32
    %23 = vector.shape_cast %22 : vector<1x128xf32> to vector<1x128xf32>
    %24 = vector.broadcast %23 : vector<1x128xf32> to vector<6x128xf32>
    %25 = vector.broadcast %cst_7 : f32 to vector<6x128xf32>
    %26 = arith.select %21, %24, %25 : vector<6x128xi1>, vector<6x128xf32>
    %27 = arith.addf %19, %26 : vector<6x128xf32>
    %c3_i32 = arith.constant 3 : i32
    %28 = vector.broadcast %c3_i32 : i32 to vector<6x128xi32>
    %29 = arith.cmpi eq, %1, %28 : vector<6x128xi32>
    %30 = vector.extract_strided_slice %0 {offsets = [3, 0], sizes = [1, 128], strides = [1, 1]} : vector<10x128xf32> to vector<1x128xf32>
    %cst_8 = arith.constant 0.000000e+00 : f32
    %31 = vector.shape_cast %30 : vector<1x128xf32> to vector<1x128xf32>
    %32 = vector.broadcast %31 : vector<1x128xf32> to vector<6x128xf32>
    %33 = vector.broadcast %cst_8 : f32 to vector<6x128xf32>
    %34 = arith.select %29, %32, %33 : vector<6x128xi1>, vector<6x128xf32>
    %35 = arith.addf %27, %34 : vector<6x128xf32>
    %c4_i32 = arith.constant 4 : i32
    %36 = vector.broadcast %c4_i32 : i32 to vector<6x128xi32>
    %37 = arith.cmpi eq, %1, %36 : vector<6x128xi32>
    %38 = vector.extract_strided_slice %0 {offsets = [4, 0], sizes = [1, 128], strides = [1, 1]} : vector<10x128xf32> to vector<1x128xf32>
    %cst_9 = arith.constant 0.000000e+00 : f32
    %39 = vector.shape_cast %38 : vector<1x128xf32> to vector<1x128xf32>
    %40 = vector.broadcast %39 : vector<1x128xf32> to vector<6x128xf32>
    %41 = vector.broadcast %cst_9 : f32 to vector<6x128xf32>
    %42 = arith.select %37, %40, %41 : vector<6x128xi1>, vector<6x128xf32>
    %43 = arith.addf %35, %42 : vector<6x128xf32>
    %c5_i32 = arith.constant 5 : i32
    %44 = vector.broadcast %c5_i32 : i32 to vector<6x128xi32>
    %45 = arith.cmpi eq, %1, %44 : vector<6x128xi32>
    %46 = vector.extract_strided_slice %0 {offsets = [5, 0], sizes = [1, 128], strides = [1, 1]} : vector<10x128xf32> to vector<1x128xf32>
    %cst_10 = arith.constant 0.000000e+00 : f32
    %47 = vector.shape_cast %46 : vector<1x128xf32> to vector<1x128xf32>
    %48 = vector.broadcast %47 : vector<1x128xf32> to vector<6x128xf32>
    %49 = vector.broadcast %cst_10 : f32 to vector<6x128xf32>
    %50 = arith.select %45, %48, %49 : vector<6x128xi1>, vector<6x128xf32>
    %51 = arith.addf %43, %50 : vector<6x128xf32>
    %c6_i32 = arith.constant 6 : i32
    %52 = vector.broadcast %c6_i32 : i32 to vector<6x128xi32>
    %53 = arith.cmpi eq, %1, %52 : vector<6x128xi32>
    %54 = vector.extract_strided_slice %0 {offsets = [6, 0], sizes = [1, 128], strides = [1, 1]} : vector<10x128xf32> to vector<1x128xf32>
    %cst_11 = arith.constant 0.000000e+00 : f32
    %55 = vector.shape_cast %54 : vector<1x128xf32> to vector<1x128xf32>
    %56 = vector.broadcast %55 : vector<1x128xf32> to vector<6x128xf32>
    %57 = vector.broadcast %cst_11 : f32 to vector<6x128xf32>
    %58 = arith.select %53, %56, %57 : vector<6x128xi1>, vector<6x128xf32>
    %59 = arith.addf %51, %58 : vector<6x128xf32>
    %c7_i32 = arith.constant 7 : i32
    %60 = vector.broadcast %c7_i32 : i32 to vector<6x128xi32>
    %61 = arith.cmpi eq, %1, %60 : vector<6x128xi32>
    %62 = vector.extract_strided_slice %0 {offsets = [7, 0], sizes = [1, 128], strides = [1, 1]} : vector<10x128xf32> to vector<1x128xf32>
    %cst_12 = arith.constant 0.000000e+00 : f32
    %63 = vector.shape_cast %62 : vector<1x128xf32> to vector<1x128xf32>
    %64 = vector.broadcast %63 : vector<1x128xf32> to vector<6x128xf32>
    %65 = vector.broadcast %cst_12 : f32 to vector<6x128xf32>
    %66 = arith.select %61, %64, %65 : vector<6x128xi1>, vector<6x128xf32>
    %67 = arith.addf %59, %66 : vector<6x128xf32>
    %c8_i32 = arith.constant 8 : i32
    %68 = vector.broadcast %c8_i32 : i32 to vector<6x128xi32>
    %69 = arith.cmpi eq, %1, %68 : vector<6x128xi32>
    %70 = vector.extract_strided_slice %0 {offsets = [8, 0], sizes = [1, 128], strides = [1, 1]} : vector<10x128xf32> to vector<1x128xf32>
    %cst_13 = arith.constant 0.000000e+00 : f32
    %71 = vector.shape_cast %70 : vector<1x128xf32> to vector<1x128xf32>
    %72 = vector.broadcast %71 : vector<1x128xf32> to vector<6x128xf32>
    %73 = vector.broadcast %cst_13 : f32 to vector<6x128xf32>
    %74 = arith.select %69, %72, %73 : vector<6x128xi1>, vector<6x128xf32>
    %75 = arith.addf %67, %74 : vector<6x128xf32>
    %c9_i32 = arith.constant 9 : i32
    %76 = vector.broadcast %c9_i32 : i32 to vector<6x128xi32>
    %77 = arith.cmpi eq, %1, %76 : vector<6x128xi32>
    %78 = vector.extract_strided_slice %0 {offsets = [9, 0], sizes = [1, 128], strides = [1, 1]} : vector<10x128xf32> to vector<1x128xf32>
    %cst_14 = arith.constant 0.000000e+00 : f32
    %79 = vector.shape_cast %78 : vector<1x128xf32> to vector<1x128xf32>
    %80 = vector.broadcast %79 : vector<1x128xf32> to vector<6x128xf32>
    %81 = vector.broadcast %cst_14 : f32 to vector<6x128xf32>
    %82 = arith.select %77, %80, %81 : vector<6x128xi1>, vector<6x128xf32>
    %83 = arith.addf %75, %82 : vector<6x128xf32>
    %cst_15 = arith.constant dense<0xFF800000> : vector<128xf32>
    %84 = vector.multi_reduction <maximumf>, %83, %cst_15 [0] : vector<6x128xf32> to vector<128xf32>
    %85 = vector.shape_cast %84 : vector<128xf32> to vector<1x128xf32>
    %86 = tpu.reciprocal %2 {approx = true} : vector<6x128xf32> -> vector<6x128xf32>
    %87 = vector.broadcast %85 : vector<1x128xf32> to vector<6x128xf32>
    %88 = arith.subf %83, %87 : vector<6x128xf32>
    %89 = math.exp %88 : vector<6x128xf32>
    %90 = arith.mulf %89, %86 : vector<6x128xf32>
    %cst_16 = arith.constant dense<0.000000e+00> : vector<128xf32>
    %91 = vector.multi_reduction <add>, %90, %cst_16 [0] : vector<6x128xf32> to vector<128xf32>
    %92 = vector.shape_cast %91 : vector<128xf32> to vector<1x128xf32>
    %cst_17 = arith.constant 1.000000e+00 : f32
    %93 = vector.broadcast %cst_17 : f32 to vector<1x128xf32>
    %94 = arith.divf %93, %92 : vector<1x128xf32>
    %95 = vector.broadcast %94 : vector<1x128xf32> to vector<6x128xf32>
    %96 = arith.mulf %90, %95 : vector<6x128xf32>
    %97 = tpu.iota {dimensions = array<i32: 0>} : vector<6x128xi32>
    %c0_i32_18 = arith.constant 0 : i32
    %98 = vector.broadcast %c0_i32_18 : i32 to vector<6x128xi32>
    %99 = arith.cmpi eq, %97, %98 : vector<6x128xi32>
    %cst_19 = arith.constant 1.000000e+00 : f32
    %100 = vector.broadcast %cst_19 : f32 to vector<6x128xf32>
    %101 = arith.subf %100, %96 : vector<6x128xf32>
    %102 = arith.select %99, %96, %101 : vector<6x128xi1>, vector<6x128xf32>
    %cst_20 = arith.constant 1.000000e-10 : f32
    %103 = vector.broadcast %cst_20 : f32 to vector<6x128xf32>
    %104 = arith.addf %102, %103 : vector<6x128xf32>
    %105 = math.log %104 : vector<6x128xf32>
    %106 = tpu.iota {dimensions = array<i32: 1>} : vector<1x128xi32>
    %c128_i32 = arith.constant 128 : i32
    %107 = arith.muli %arg0, %c128_i32 : i32
    %108 = vector.broadcast %107 : i32 to vector<1x128xi32>
    %109 = arith.addi %108, %106 : vector<1x128xi32>
    %c8_i32_21 = arith.constant 8 : i32
    %110 = vector.broadcast %c8_i32_21 : i32 to vector<1x128xi32>
    %111 = arith.cmpi slt, %109, %110 : vector<1x128xi32>
    %cst_22 = arith.constant 0.000000e+00 : f32
    %112 = vector.shape_cast %111 : vector<1x128xi1> to vector<1x128xi1>
    %113 = vector.broadcast %112 : vector<1x128xi1> to vector<6x128xi1>
    %114 = vector.broadcast %cst_22 : f32 to vector<6x128xf32>
    %115 = arith.select %113, %105, %114 : vector<6x128xi1>, vector<6x128xf32>
    %116 = vector.shape_cast %115 : vector<6x128xf32> to vector<1x6x128xf32>
    %cst_23 = arith.constant dense<0.000000e+00> : vector<1xf32>
    %117 = vector.multi_reduction <add>, %116, %cst_23 [1, 2] : vector<1x6x128xf32> to vector<1xf32>
    %118 = vector.shape_cast %117 : vector<1xf32> to vector<1x1x1xf32>
    %119 = vector.extract %118[0, 0, 0] : f32 from vector<1x1x1xf32>
    %120 = vector.broadcast %119 : f32 to vector<1x128xf32>
    %c0_24 = arith.constant 0 : index
    %c0_25 = arith.constant 0 : index
    %121 = vector.load %arg4[%c0_24, %c0_25] : memref<1x128xf32, #tpu.memory_space<vmem>>, vector<1x128xf32>
    tpu.vector_store %arg4[%c0_24, %c0_25], %120 {strides = array<i32>} : memref<1x128xf32, #tpu.memory_space<vmem>>, vector<1x128xf32>,
    return
  }
  func.func @transform_0(%arg0: i32) -> (i32, i32) {
    %c0_i32 = arith.constant 0 : i32
    %c0_i32_0 = arith.constant 0 : i32
    return %c0_i32, %arg0 : i32, i32
  }
  func.func @transform_1(%arg0: i32) -> (i32, i32) {
    %c0_i32 = arith.constant 0 : i32
    %c0_i32_0 = arith.constant 0 : i32
    return %c0_i32, %arg0 : i32, i32
  }
  func.func @transform_2(%arg0: i32) -> (i32, i32) {
    %c0_i32 = arith.constant 0 : i32
    %c0_i32_0 = arith.constant 0 : i32
    return %c0_i32, %arg0 : i32, i32
  }
  func.func @transform_3(%arg0: i32) -> (i32, i32) {
    %c0_i32 = arith.constant 0 : i32
    %c0_i32_0 = arith.constant 0 : i32
    return %c0_i32, %arg0 : i32, i32
  }
}

</mosaic_0001>

<llo_original>
// kernel: tpu_custom_call.1
$region0: #{tpu_custom_call.1}
  #allocation0 [shape = 'u32[]', space=smem, size = 0x4, offset = 0x4, fixed_abs, tag = 'smem constant byte address 0x4 - core index']
  #allocation1 [shape = 'u32[144,128]{1,0:T(1,128)}', space=vmem, size = 0x12000, scoped, tag = 'internal scratch']
  %s0 = inlined_call_operand.hbm [shape: f32[10,128], index: 0, kind: input, shape index: {}]
  %s1 = inlined_call_operand.hbm [shape: s32[6,128], index: 1, kind: input, shape index: {}]
  %s2 = inlined_call_operand.hbm [shape: f32[6,128], index: 2, kind: input, shape index: {}]
  %s3 = inlined_call_operand.hbm [shape: f32[1,128], index: 3, kind: output, shape index: {}]
  %s4 = sld [smem:[#allocation0]]
  $region34: #{tpu_custom_call.1} parent=0
    _
  %s6 = ssub.s32 1, %s4
  %s7 = scalar_select 0, %s6, %s4
  $region1: #{tpu_custom_call.1} parent=0
    #allocation2 [shape = 'u8[8192]{0}', space=vmem, size = 0x2000, scoped, tag = 'input window, operand 0, single buffered']
    #allocation3 [shape = 's32[1]{0}', space=sflag, size = 0x4, scoped, tag = 'scoped memory for tpu_custom_call.1']
    #allocation4 [shape = 's32[1]{0}', space=sflag, size = 0x4, scoped, tag = 'scoped memory for tpu_custom_call.1']
    #allocation5 [shape = 'u8[4096]{0}', space=vmem, size = 0x1000, scoped, tag = 'input window, operand 1, single buffered']
    #allocation6 [shape = 's32[1]{0}', space=sflag, size = 0x4, scoped, tag = 'scoped memory for tpu_custom_call.1']
    #allocation7 [shape = 'u8[4096]{0}', space=vmem, size = 0x1000, scoped, tag = 'input window, operand 2, single buffered']
    #allocation8 [shape = 'u8[512]{0}', space=vmem, size = 0x400, scoped, tag = 'output window, operand 0, single buffered']
    %8 = vsyncpa [#allocation3], 0
    %9 = vsyncpa [#allocation6], 0
    %10 = vsyncpa [#allocation4], 0
    // Predicated region
    $region2: #{tpu_custom_call.1} parent=1 // pred_check
      _
    $region3: #{tpu_custom_call.1} parent=1 // pred_check_branch
      %12 = sbr.rel (0) target = $region5
    $region4: #{tpu_custom_call.1} parent=1 // pred_region
      %s14 = ssub.s32 256, 256
      %15 = vsyncadd [#allocation3], %s14
      %s16 = sshll.u32 [#allocation2], 4
      %s17 = int_to_ptr.vmem [resolvable:$true] %s16
      %22 = dma.hbm_to_vmem [thread:$0]  %s0, 256, %s17, [#allocation3], 128, 128, 8
    $region5: #{tpu_custom_call.1} parent=1 // pred_fallthru
      _
    // Predicated region
    $region6: #{tpu_custom_call.1} parent=1 // pred_check
      _
    $region7: #{tpu_custom_call.1} parent=1 // pred_check_branch
      %24 = sbr.rel (0) target = $region9
    $region8: #{tpu_custom_call.1} parent=1 // pred_region
      %s26 = ssub.s32 128, 128
      %27 = vsyncadd [#allocation6], %s26
      %s29 = sshll.u32 [#allocation5], 4
      %s30 = int_to_ptr.vmem [resolvable:$true] %s29
      %32 = dma.hbm_to_vmem [thread:$0]  %s1, 128, %s30, [#allocation6]
    $region9: #{tpu_custom_call.1} parent=1 // pred_fallthru
      _
    // Predicated region
    $region10: #{tpu_custom_call.1} parent=1 // pred_check
      _
    $region11: #{tpu_custom_call.1} parent=1 // pred_check_branch
      %34 = sbr.rel (0) target = $region13
    $region12: #{tpu_custom_call.1} parent=1 // pred_region
      %s36 = ssub.s32 128, 128
      %37 = vsyncadd [#allocation6], %s36
      %s39 = sshll.u32 [#allocation7], 4
      %s40 = int_to_ptr.vmem [resolvable:$true] %s39
      %42 = dma.hbm_to_vmem [thread:$0]  %s2, 128, %s40, [#allocation6]
    $region13: #{tpu_custom_call.1} parent=1 // pred_fallthru
      _
    // Predicated region
    $region14: #{tpu_custom_call.1} parent=1 // pred_check
      _
    $region15: #{tpu_custom_call.1} parent=1 // pred_check_branch
      %44 = sbr.rel (0) target = $region17
    $region16: #{tpu_custom_call.1} parent=1 // pred_region
      %45 = dma.done [#allocation3], 256
    $region17: #{tpu_custom_call.1} parent=1 // pred_fallthru
      _
    // Predicated region
    $region18: #{tpu_custom_call.1} parent=1 // pred_check
      _
    $region19: #{tpu_custom_call.1} parent=1 // pred_check_branch
      %47 = sbr.rel (0) target = $region21
    $region20: #{tpu_custom_call.1} parent=1 // pred_region
      %48 = dma.done [#allocation6], 128
    $region21: #{tpu_custom_call.1} parent=1 // pred_fallthru
      _
    // Predicated region
    $region22: #{tpu_custom_call.1} parent=1 // pred_check
      _
    $region23: #{tpu_custom_call.1} parent=1 // pred_check_branch
      %50 = sbr.rel (0) target = $region25
    $region24: #{tpu_custom_call.1} parent=1 // pred_region
      %51 = dma.done [#allocation6], 128
    $region25: #{tpu_custom_call.1} parent=1 // pred_fallthru
      _
    %v52 = vld [vmem:[#allocation2] sm:$0xff]
    %v53 = vld [vmem:[#allocation2 + $0x8] sm:$0x3]
    %v54 = vld [vmem:[#allocation5] sm:$0x3f]
    %v55 = vld [vmem:[#allocation7] sm:$0x3f]
    %vm56 = vcmp.eq.s32.totalorder %v54, 0
    %v57 = vlaneseq
    %v58 = vshrl.u32 %v57, 7
    %v59 = vsub.s32 0, %v58
    %v60 = vrot.slane %v52, %v59
    %v61 = vsel %vm56, %v60, 0.0
    %v62 = vadd.f32 %v61, 0.0
    %vm63 = vcmp.eq.s32.totalorder %v54, 1
    %v64 = vlaneseq
    %v65 = vshrl.u32 %v64, 7
    %v66 = vsub.s32 1, %v65
    %v67 = vrot.slane %v52, %v66
    %v68 = vsel %vm63, %v67, 0.0
    %v69 = vadd.f32 %v62, %v68
    %vm70 = vcmp.eq.s32.totalorder %v54, 2
    %v71 = vlaneseq
    %v72 = vshrl.u32 %v71, 7
    %v73 = vsub.s32 2, %v72
    %v74 = vrot.slane %v52, %v73
    %v75 = vsel %vm70, %v74, 0.0
    %v76 = vadd.f32 %v69, %v75
    %vm77 = vcmp.eq.s32.totalorder %v54, 3
    %v78 = vlaneseq
    %v79 = vshrl.u32 %v78, 7
    %v80 = vsub.s32 3, %v79
    %v81 = vrot.slane %v52, %v80
    %v82 = vsel %vm77, %v81, 0.0
    %v83 = vadd.f32 %v76, %v82
    %vm84 = vcmp.eq.s32.totalorder %v54, 4
    %v85 = vlaneseq
    %v86 = vshrl.u32 %v85, 7
    %v87 = vsub.s32 4, %v86
    %v88 = vrot.slane %v52, %v87
    %v89 = vsel %vm84, %v88, 0.0
    %v90 = vadd.f32 %v83, %v89
    %vm91 = vcmp.eq.s32.totalorder %v54, 5
    %v92 = vlaneseq
    %v93 = vshrl.u32 %v92, 7
    %v94 = vsub.s32 5, %v93
    %v95 = vrot.slane %v52, %v94
    %v96 = vsel %vm91, %v95, 0.0
    %v97 = vadd.f32 %v90, %v96
    %vm98 = vcmp.eq.s32.totalorder %v54, 6
    %v99 = vlaneseq
    %v100 = vshrl.u32 %v99, 7
    %v101 = vsub.s32 6, %v100
    %v102 = vrot.slane %v52, %v101
    %v103 = vsel %vm98, %v102, 0.0
    %v104 = vadd.f32 %v97, %v103
    %vm105 = vcmp.eq.s32.totalorder %v54, 7
    %v106 = vlaneseq
    %v107 = vshrl.u32 %v106, 7
    %v108 = vsub.s32 7, %v107
    %v109 = vrot.slane %v52, %v108
    %v110 = vsel %vm105, %v109, 0.0
    %v111 = vadd.f32 %v104, %v110
    %vm112 = vcmp.eq.s32.totalorder %v54, 8
    %v113 = vlaneseq
    %v114 = vshrl.u32 %v113, 7
    %v115 = vsub.s32 0, %v114
    %v116 = vrot.slane %v53, %v115
    %v117 = vsel %vm112, %v116, 0.0
    %v118 = vadd.f32 %v111, %v117
    %vm119 = vcmp.eq.s32.totalorder %v54, 9
    %v120 = vlaneseq
    %v121 = vshrl.u32 %v120, 7
    %v122 = vsub.s32 1, %v121
    %v123 = vrot.slane %v53, %v122
    %v124 = vsel %vm119, %v123, 0.0
    %v125 = vadd.f32 %v118, %v124
    %vm126 = vcmask 1045504
    %v127 = vsel %vm126, %v125, -inf
    %v128 = vrot.slane %v127, 4
    %v129 = vmax.f32 %v127, %v128
    %v130 = vrot.slane %v129, 2
    %v131 = vmax.f32 %v129, %v130
    %v132 = vrot.slane %v131, 1
    %v133 = vmax.f32 %v131, %v132
    %v134 = vrcp.pop %v55
    %v135 = vsub.f32 %v125, %v133
    %v136 = vmul.f32 %v135, 1.442695
    %v137 = vpow.pop %v136
    %v138 = vmul.f32 %v137, %v134
    %v139 = vsel %vm126, %v138, 0.0
    %v140 = vrot.slane %v139, 4
    %v141 = vadd.f32 %v139, %v140
    %v142 = vrot.slane %v141, 2
    %v143 = vadd.f32 %v141, %v142
    %v144 = vrot.slane %v143, 1
    %v145 = vadd.f32 %v143, %v144
    %v146 = vrcp.pop %v145
    %v147 = vmul.f32 1.0, %v146
    %v148 = vmul.f32 %v138, %v147
    %v149 = vlaneseq
    %v150 = vshrl.u32 %v149, 7
    %vm151 = vcmp.eq.s32.totalorder %v150, 0
    %v152 = vsub.f32 1.0, %v148
    %v153 = vsel %vm151, %v148, %v152
    %v154 = vadd.f32 %v153, 1e-10
    %v155 = vlog2.pop %v154
    %v156 = vmul.f32 %v155, 0.6931472
    %v157 = vlaneseq
    %v158 = vand.u32 %v157, 127
    %s159 = smul.u32 0, 128
    %v160 = vstv %s159
    %v161 = vadd.s32 %v160, %v158
    %vm162 = vcmp.lt.s32.totalorder %v161, 8
    %v163 = vsel %vm162, 1, 0
    %vm164 = vcmp.eq.s32.totalorder %v163, 1
    %v165 = vsel %vm164, %v156, 0.0
    %v166 = vsel %vm126, %v165, 0.0
    %167 = vadd.xlane.f32.xlu0 %v166
    %v168 = vpop.xlane.xlu0 %167
    %v169 = vrot.slane %v168, 4
    %v170 = vadd.f32 %v168, %v169
    %v171 = vrot.slane %v170, 2
    %v172 = vadd.f32 %v170, %v171
    %v173 = vrot.slane %v172, 1
    %v174 = vadd.f32 %v172, %v173
    %s175 = vtos %v174
    %v176 = vstv %s175
    %177 = vst [vmem:[#allocation8] sm:$0x1] %v176
    // Predicated region
    $region26: #{tpu_custom_call.1} parent=1 // pred_check
      _
    $region27: #{tpu_custom_call.1} parent=1 // pred_check_branch
      %179 = sbr.rel (0) target = $region29
    $region28: #{tpu_custom_call.1} parent=1 // pred_region
      %s181 = ssub.s32 16, 16
      %182 = vsyncadd [#allocation4], %s181
      %s184 = sshll.u32 [#allocation8], 4
      %s185 = int_to_ptr.vmem [resolvable:$true] %s184
      %187 = dma.vmem_to_hbm [thread:$0]  %s185, 16, %s3, [#allocation4]
    $region29: #{tpu_custom_call.1} parent=1 // pred_fallthru
      _
    // Predicated region
    $region30: #{tpu_custom_call.1} parent=1 // pred_check
      _
    $region31: #{tpu_custom_call.1} parent=1 // pred_check_branch
      %189 = sbr.rel (0) target = $region33
    $region32: #{tpu_custom_call.1} parent=1 // pred_region
      %190 = dma.done [#allocation4], 16
    $region33: #{tpu_custom_call.1} parent=1 // pred_fallthru
      _
    %191 = vsyncpa [#allocation3], 1
    %192 = vsyncpa [#allocation6], 1
    %193 = vsyncpa [#allocation4], 1

</llo_original>
